<compile_context>
chip_gen: v7x
topology: tpu7x:2x2x1
jax: 0.10.0
libtpu: 0.0.40
codegen_flags: <defaults>
</compile_context>

<pallas_src>
import functools

import jax
import jax.numpy as jnp
from jax.experimental import pallas as pl
from jax.experimental.pallas import tpu as pltpu

TB_MAX = 256   # max batch-row tile
LANE = 128     # output lane padding granularity


def _round_up(x, m):
    return ((x + m - 1) // m) * m


# ------------------------------------------------------------------------------- kernel

def _decoder_kernel(x_ref, w_ref, b_ref, o_ref, *, inv_hw):
    # x_ref: (TB, C, HW)  activations in native NCHW order with spatial flattened onto lanes
    # w_ref: (C, NCP)     linear weight, transposed + lane-padded (VMEM-resident)
    # b_ref: (1, NCP)     bias, lane-padded (VMEM-resident)
    # o_ref: (TB, NCP)
    pooled = jnp.sum(x_ref[...], axis=2) * inv_hw                        # global avg pool (XLU)
    out = jnp.dot(pooled, w_ref[...], preferred_element_type=jnp.float32) + b_ref[...]
    o_ref[...] = out.astype(o_ref.dtype)


# ------------------------------------------------------------------------------- wrapper

def resnet_decoder_forward(x_nchw, params):
    """x_nchw: (N, C, H, W). params: {'weight': (n_classes, C), 'bias': (n_classes,)}."""
    n, c, h, w = x_nchw.shape
    hw = h * w
    n_classes = params["weight"].shape[0]

    # Contiguous reshape only (no transpose, no extra HBM round-trip): (N, C, H*W).
    x = x_nchw.astype(jnp.float32).reshape(n, c, hw)

    # Lane-dense output: pad classes to a multiple of 128 with zeros, slice after the kernel.
    ncp = _round_up(n_classes, LANE)
    w_mat = jnp.pad(params["weight"].astype(jnp.float32).T, ((0, 0), (0, ncp - n_classes)))
    b_vec = jnp.pad(params["bias"].astype(jnp.float32), (0, ncp - n_classes)).reshape(1, ncp)

    # Sublane-align and tile the batch dimension; keep the double-buffered activation tile
    # within ~8 MiB of VMEM.
    bytes_per_row = 4 * c * hw
    tb = max(8, min(TB_MAX, ((4 << 20) // max(bytes_per_row, 1)) // 8 * 8))
    tb = min(tb, _round_up(n, 8))
    np_ = _round_up(n, tb)
    if np_ != n:
        x = jnp.pad(x, ((0, np_ - n), (0, 0), (0, 0)))

    flops = np_ * hw * c + 2 * np_ * c * ncp
    bytes_accessed = 4 * (np_ * hw * c + c * ncp + ncp + np_ * ncp)

    out = pl.pallas_call(
        functools.partial(_decoder_kernel, inv_hw=1.0 / hw),
        out_shape=jax.ShapeDtypeStruct((np_, ncp), jnp.float32),
        grid_spec=pltpu.PrefetchScalarGridSpec(
            num_scalar_prefetch=0,
            grid=(np_ // tb,),
            in_specs=[
                pl.BlockSpec((tb, c, hw), lambda i: (i, 0, 0)),   # activation tile (streamed)
                pl.BlockSpec((c, ncp), lambda i: (0, 0)),          # weight (VMEM-resident)
                pl.BlockSpec((1, ncp), lambda i: (0, 0)),          # bias   (VMEM-resident)
            ],
            out_specs=pl.BlockSpec((tb, ncp), lambda i: (i, 0)),
        ),
        compiler_params=pltpu.CompilerParams(dimension_semantics=("parallel",)),
        cost_estimate=pl.CostEstimate(flops=flops, transcendentals=0,
                                      bytes_accessed=bytes_accessed),
    )(x, w_mat, b_vec)

    return out[:n, :n_classes]


# ------------------------------------------------------------------------------- main

if __name__ == "__main__":
    key = jax.random.PRNGKey(0)
    k_w, k_b, k_x = jax.random.split(key, 3)

    in_features, n_classes = 64, 10
    batch, h, w = 2, 8, 8

    bound = 1.0 / jnp.sqrt(jnp.float32(in_features))
    params = dict(
        weight=jax.random.uniform(k_w, (n_classes, in_features), jnp.float32, -bound, bound),
        bias=jax.random.uniform(k_b, (n_classes,), jnp.float32, -bound, bound),
    )
    x = jax.random.normal(k_x, (batch, in_features, h, w), jnp.float32)  # NCHW input

    out = jax.block_until_ready(resnet_decoder_forward(x, params))

    # pure-JAX reference: AdaptiveAvgPool2d((1,1)) -> flatten -> Linear
    ref = jnp.mean(x, axis=(2, 3)) @ params["weight"].T + params["bias"]

    assert out.shape == (batch, n_classes), out.shape
    assert jnp.isfinite(out).all()
    assert jnp.allclose(out, ref, atol=1e-4, rtol=1e-4), float(jnp.max(jnp.abs(out - ref)))
    print("KERNEL_OK")
</pallas_src>

<mosaic_0001>
module attributes {stable_mosaic.version = 11 : i64} {
  func.func @_decoder_kernel(%arg0: i32, %arg1: memref<8x64x64xf32, #tpu.memory_space<vmem>>, %arg2: memref<64x128xf32, #tpu.memory_space<vmem>>, %arg3: memref<1x128xf32, #tpu.memory_space<vmem>>, %arg4: memref<8x128xf32, #tpu.memory_space<vmem>>) attributes {dimension_semantics = [#tpu.dimension_semantics<parallel>], iteration_bounds = array<i64: 1>, scalar_prefetch = 0 : i64, scratch_operands = 0 : i64, tpu.core_type = #tpu.core_type<tc>, window_params = [{transform_indices = @transform_0, window_bounds = array<i64: 8, 64, 64>}, {pipeline_mode = #tpu.pipeline_mode<synchronous>, transform_indices = @transform_1, window_bounds = array<i64: 64, 128>}, {pipeline_mode = #tpu.pipeline_mode<synchronous>, transform_indices = @transform_2, window_bounds = array<i64: 1, 128>}, {transform_indices = @transform_3, window_bounds = array<i64: 8, 128>}]} {
    %c0 = arith.constant 0 : index
    %c0_0 = arith.constant 0 : index
    %c0_1 = arith.constant 0 : index
    %0 = vector.load %arg1[%c0, %c0_0, %c0_1] : memref<8x64x64xf32, #tpu.memory_space<vmem>>, vector<8x64x64xf32>
    %cst = arith.constant dense<0.000000e+00> : vector<8x64xf32>
    %1 = vector.multi_reduction <add>, %0, %cst [2] : vector<8x64x64xf32> to vector<8x64xf32>
    %cst_2 = arith.constant 1.562500e-02 : f32
    %2 = vector.broadcast %cst_2 : f32 to vector<8x64xf32>
    %3 = arith.mulf %1, %2 : vector<8x64xf32>
    %c0_3 = arith.constant 0 : index
    %c0_4 = arith.constant 0 : index
    %4 = vector.load %arg2[%c0_3, %c0_4] : memref<64x128xf32, #tpu.memory_space<vmem>>, vector<64x128xf32>
    %cst_5 = arith.constant dense<0.000000e+00> : vector<8x128xf32>
    %5 = tpu.matmul %3, %4, %cst_5 {dimension_numbers = #tpu.dot_dimension_numbers<[1], [0], [0], [1], [0, 0, 1, 1], [], []>} : vector<8x64xf32>, vector<64x128xf32>, vector<8x128xf32> -> vector<8x128xf32>
    %c0_6 = arith.constant 0 : index
    %c0_7 = arith.constant 0 : index
    %6 = vector.load %arg3[%c0_6, %c0_7] : memref<1x128xf32, #tpu.memory_space<vmem>>, vector<1x128xf32>
    %7 = vector.broadcast %6 : vector<1x128xf32> to vector<8x128xf32>
    %8 = arith.addf %5, %7 : vector<8x128xf32>
    %c0_8 = arith.constant 0 : index
    %c0_9 = arith.constant 0 : index
    %9 = vector.load %arg4[%c0_8, %c0_9] : memref<8x128xf32, #tpu.memory_space<vmem>>, vector<8x128xf32>
    tpu.vector_store %arg4[%c0_8, %c0_9], %8 {strides = array<i32>} : memref<8x128xf32, #tpu.memory_space<vmem>>, vector<8x128xf32>,
    return
  }
  func.func @transform_0(%arg0: i32) -> (i32, i32, i32) {
    %c0_i32 = arith.constant 0 : i32
    %c0_i32_0 = arith.constant 0 : i32
    %c0_i32_1 = arith.constant 0 : i32
    return %arg0, %c0_i32, %c0_i32_0 : i32, i32, i32
  }
  func.func @transform_1(%arg0: i32) -> (i32, i32) {
    %c0_i32 = arith.constant 0 : i32
    %c0_i32_0 = arith.constant 0 : i32
    %c0_i32_1 = arith.constant 0 : i32
    return %c0_i32, %c0_i32_0 : i32, i32
  }
  func.func @transform_2(%arg0: i32) -> (i32, i32) {
    %c0_i32 = arith.constant 0 : i32
    %c0_i32_0 = arith.constant 0 : i32
    %c0_i32_1 = arith.constant 0 : i32
    return %c0_i32, %c0_i32_0 : i32, i32
  }
  func.func @transform_3(%arg0: i32) -> (i32, i32) {
    %c0_i32 = arith.constant 0 : i32
    %c0_i32_0 = arith.constant 0 : i32
    return %arg0, %c0_i32 : i32, i32
  }
}

</mosaic_0001>

<llo_original>
// kernel: tpu_custom_call.1
$region0: #{tpu_custom_call.1}
  #allocation0 [shape = 'u32[]', space=smem, size = 0x4, offset = 0x4, fixed_abs, tag = 'smem constant byte address 0x4 - core index']
  #allocation1 [shape = 'u32[144,128]{1,0:T(1,128)}', space=vmem, size = 0x12000, scoped, tag = 'internal scratch']
  %s0 = inlined_call_operand.hbm [shape: f32[8,64,64], index: 0, kind: input, shape index: {}]
  %s1 = inlined_call_operand.hbm [shape: f32[64,128], index: 1, kind: input, shape index: {}]
  %s2 = inlined_call_operand.vmem [shape: f32[1,128], index: 2, kind: input, shape index: {}]
  %s3 = inlined_call_operand.hbm [shape: f32[8,128], index: 3, kind: output, shape index: {}]
  %s4 = sld [smem:[#allocation0]]
  $region30: #{tpu_custom_call.1} parent=0
    _
  %s6 = ssub.s32 1, %s4
  %s7 = scalar_select 0, %s6, %s4
  $region1: #{tpu_custom_call.1} parent=0
    #allocation2 [shape = 'u8[262144]{0}', space=vmem, size = 0x40000, scoped, tag = 'input window, operand 0, single buffered']
    #allocation3 [shape = 's32[1]{0}', space=sflag, size = 0x4, scoped, tag = 'scoped memory for tpu_custom_call.1']
    #allocation4 [shape = 's32[1]{0}', space=sflag, size = 0x4, scoped, tag = 'scoped memory for tpu_custom_call.1']
    #allocation5 [shape = 'u8[32768]{0}', space=vmem, size = 0x8000, scoped, tag = 'input window, operand 1, single buffered']
    #allocation6 [shape = 's32[1]{0}', space=sflag, size = 0x4, scoped, tag = 'scoped memory for tpu_custom_call.1']
    #allocation7 [shape = 'u8[4096]{0}', space=vmem, size = 0x1000, scoped, tag = 'output window, operand 0, single buffered']
    %8 = vsyncpa [#allocation3], 0
    %9 = vsyncpa [#allocation6], 0
    %10 = vsyncpa [#allocation4], 0
    // Predicated region
    $region2: #{tpu_custom_call.1} parent=1 // pred_check
      _
    $region3: #{tpu_custom_call.1} parent=1 // pred_check_branch
      %12 = sbr.rel (0) target = $region5
    $region4: #{tpu_custom_call.1} parent=1 // pred_region
      %s14 = ssub.s32 8192, 8192
      %15 = vsyncadd [#allocation3], %s14
      %s16 = sshll.u32 [#allocation2], 4
      %s17 = int_to_ptr.vmem [resolvable:$true] %s16
      %22 = dma.hbm_to_vmem [thread:$0]  %s0, 8192, %s17, [#allocation3], 128, 128, 8
    $region5: #{tpu_custom_call.1} parent=1 // pred_fallthru
      _
    // Predicated region
    $region6: #{tpu_custom_call.1} parent=1 // pred_check
      _
    $region7: #{tpu_custom_call.1} parent=1 // pred_check_branch
      %24 = sbr.rel (0) target = $region9
    $region8: #{tpu_custom_call.1} parent=1 // pred_region
      %s26 = ssub.s32 1024, 1024
      %27 = vsyncadd [#allocation6], %s26
      %s28 = sshll.u32 [#allocation5], 4
      %s29 = int_to_ptr.vmem [resolvable:$true] %s28
      %34 = dma.hbm_to_vmem [thread:$0]  %s1, 1024, %s29, [#allocation6], 128, 128, 8
    $region9: #{tpu_custom_call.1} parent=1 // pred_fallthru
      _
    // Predicated region
    $region10: #{tpu_custom_call.1} parent=1 // pred_check
      _
    $region11: #{tpu_custom_call.1} parent=1 // pred_check_branch
      %36 = sbr.rel (0) target = $region13
    $region12: #{tpu_custom_call.1} parent=1 // pred_region
      _
    $region13: #{tpu_custom_call.1} parent=1 // pred_fallthru
      _
    // Predicated region
    $region14: #{tpu_custom_call.1} parent=1 // pred_check
      _
    $region15: #{tpu_custom_call.1} parent=1 // pred_check_branch
      %38 = sbr.rel (0) target = $region17
    $region16: #{tpu_custom_call.1} parent=1 // pred_region
      %39 = dma.done [#allocation3], 8192
    $region17: #{tpu_custom_call.1} parent=1 // pred_fallthru
      _
    // Predicated region
    $region18: #{tpu_custom_call.1} parent=1 // pred_check
      _
    $region19: #{tpu_custom_call.1} parent=1 // pred_check_branch
      %41 = sbr.rel (0) target = $region21
    $region20: #{tpu_custom_call.1} parent=1 // pred_region
      %42 = dma.done [#allocation6], 1024
    $region21: #{tpu_custom_call.1} parent=1 // pred_fallthru
      _
    %v43 = vld [vmem:[#allocation2] sm:$0xff]
    %v44 = vld [vmem:[#allocation2 + $0x8] sm:$0xff]
    %v45 = vld [vmem:[#allocation2 + $0x10] sm:$0xff]
    %v46 = vld [vmem:[#allocation2 + $0x18] sm:$0xff]
    %v47 = vld [vmem:[#allocation2 + $0x20] sm:$0xff]
    %v48 = vld [vmem:[#allocation2 + $0x28] sm:$0xff]
    %v49 = vld [vmem:[#allocation2 + $0x30] sm:$0xff]
    %v50 = vld [vmem:[#allocation2 + $0x38] sm:$0xff]
    %v51 = vld [vmem:[#allocation2 + $0x40] sm:$0xff]
    %v52 = vld [vmem:[#allocation2 + $0x48] sm:$0xff]
    %v53 = vld [vmem:[#allocation2 + $0x50] sm:$0xff]
    %v54 = vld [vmem:[#allocation2 + $0x58] sm:$0xff]
    %v55 = vld [vmem:[#allocation2 + $0x60] sm:$0xff]
    %v56 = vld [vmem:[#allocation2 + $0x68] sm:$0xff]
    %v57 = vld [vmem:[#allocation2 + $0x70] sm:$0xff]
    %v58 = vld [vmem:[#allocation2 + $0x78] sm:$0xff]
    %v59 = vld [vmem:[#allocation2 + $0x80] sm:$0xff]
    %v60 = vld [vmem:[#allocation2 + $0x88] sm:$0xff]
    %v61 = vld [vmem:[#allocation2 + $0x90] sm:$0xff]
    %v62 = vld [vmem:[#allocation2 + $0x98] sm:$0xff]
    %v63 = vld [vmem:[#allocation2 + $0xa0] sm:$0xff]
    %v64 = vld [vmem:[#allocation2 + $0xa8] sm:$0xff]
    %v65 = vld [vmem:[#allocation2 + $0xb0] sm:$0xff]
    %v66 = vld [vmem:[#allocation2 + $0xb8] sm:$0xff]
    %v67 = vld [vmem:[#allocation2 + $0xc0] sm:$0xff]
    %v68 = vld [vmem:[#allocation2 + $0xc8] sm:$0xff]
    %v69 = vld [vmem:[#allocation2 + $0xd0] sm:$0xff]
    %v70 = vld [vmem:[#allocation2 + $0xd8] sm:$0xff]
    %v71 = vld [vmem:[#allocation2 + $0xe0] sm:$0xff]
    %v72 = vld [vmem:[#allocation2 + $0xe8] sm:$0xff]
    %v73 = vld [vmem:[#allocation2 + $0xf0] sm:$0xff]
    %v74 = vld [vmem:[#allocation2 + $0xf8] sm:$0xff]
    %v75 = vld [vmem:[#allocation2 + $0x100] sm:$0xff]
    %v76 = vld [vmem:[#allocation2 + $0x108] sm:$0xff]
    %v77 = vld [vmem:[#allocation2 + $0x110] sm:$0xff]
    %v78 = vld [vmem:[#allocation2 + $0x118] sm:$0xff]
    %v79 = vld [vmem:[#allocation2 + $0x120] sm:$0xff]
    %v80 = vld [vmem:[#allocation2 + $0x128] sm:$0xff]
    %v81 = vld [vmem:[#allocation2 + $0x130] sm:$0xff]
    %v82 = vld [vmem:[#allocation2 + $0x138] sm:$0xff]
    %v83 = vld [vmem:[#allocation2 + $0x140] sm:$0xff]
    %v84 = vld [vmem:[#allocation2 + $0x148] sm:$0xff]
    %v85 = vld [vmem:[#allocation2 + $0x150] sm:$0xff]
    %v86 = vld [vmem:[#allocation2 + $0x158] sm:$0xff]
    %v87 = vld [vmem:[#allocation2 + $0x160] sm:$0xff]
    %v88 = vld [vmem:[#allocation2 + $0x168] sm:$0xff]
    %v89 = vld [vmem:[#allocation2 + $0x170] sm:$0xff]
    %v90 = vld [vmem:[#allocation2 + $0x178] sm:$0xff]
    %v91 = vld [vmem:[#allocation2 + $0x180] sm:$0xff]
    %v92 = vld [vmem:[#allocation2 + $0x188] sm:$0xff]
    %v93 = vld [vmem:[#allocation2 + $0x190] sm:$0xff]
    %v94 = vld [vmem:[#allocation2 + $0x198] sm:$0xff]
    %v95 = vld [vmem:[#allocation2 + $0x1a0] sm:$0xff]
    %v96 = vld [vmem:[#allocation2 + $0x1a8] sm:$0xff]
    %v97 = vld [vmem:[#allocation2 + $0x1b0] sm:$0xff]
    %v98 = vld [vmem:[#allocation2 + $0x1b8] sm:$0xff]
    %v99 = vld [vmem:[#allocation2 + $0x1c0] sm:$0xff]
    %v100 = vld [vmem:[#allocation2 + $0x1c8] sm:$0xff]
    %v101 = vld [vmem:[#allocation2 + $0x1d0] sm:$0xff]
    %v102 = vld [vmem:[#allocation2 + $0x1d8] sm:$0xff]
    %v103 = vld [vmem:[#allocation2 + $0x1e0] sm:$0xff]
    %v104 = vld [vmem:[#allocation2 + $0x1e8] sm:$0xff]
    %v105 = vld [vmem:[#allocation2 + $0x1f0] sm:$0xff]
    %v106 = vld [vmem:[#allocation2 + $0x1f8] sm:$0xff]
    %vm107 = vcmask 523264
    %v108 = vsel %vm107, %v43, 0.0
    %109 = vadd.xlane.f32.xlu0 %v108
    %v110 = vpop.xlane.xlu0 %109
    %v111 = vsel %vm107, %v44, 0.0
    %112 = vadd.xlane.f32.xlu0 %v111
    %v113 = vpop.xlane.xlu0 %112
    %v114 = vsel %vm107, %v45, 0.0
    %115 = vadd.xlane.f32.xlu0 %v114
    %v116 = vpop.xlane.xlu0 %115
    %v117 = vsel %vm107, %v46, 0.0
    %118 = vadd.xlane.f32.xlu0 %v117
    %v119 = vpop.xlane.xlu0 %118
    %v120 = vsel %vm107, %v47, 0.0
    %121 = vadd.xlane.f32.xlu0 %v120
    %v122 = vpop.xlane.xlu0 %121
    %v123 = vsel %vm107, %v48, 0.0
    %124 = vadd.xlane.f32.xlu0 %v123
    %v125 = vpop.xlane.xlu0 %124
    %v126 = vsel %vm107, %v49, 0.0
    %127 = vadd.xlane.f32.xlu0 %v126
    %v128 = vpop.xlane.xlu0 %127
    %v129 = vsel %vm107, %v50, 0.0
    %130 = vadd.xlane.f32.xlu0 %v129
    %v131 = vpop.xlane.xlu0 %130
    %v132 = vsel %vm107, %v51, 0.0
    %133 = vadd.xlane.f32.xlu0 %v132
    %v134 = vpop.xlane.xlu0 %133
    %v135 = vsel %vm107, %v52, 0.0
    %136 = vadd.xlane.f32.xlu0 %v135
    %v137 = vpop.xlane.xlu0 %136
    %v138 = vsel %vm107, %v53, 0.0
    %139 = vadd.xlane.f32.xlu0 %v138
    %v140 = vpop.xlane.xlu0 %139
    %v141 = vsel %vm107, %v54, 0.0
    %142 = vadd.xlane.f32.xlu0 %v141
    %v143 = vpop.xlane.xlu0 %142
    %v144 = vsel %vm107, %v55, 0.0
    %145 = vadd.xlane.f32.xlu0 %v144
    %v146 = vpop.xlane.xlu0 %145
    %v147 = vsel %vm107, %v56, 0.0
    %148 = vadd.xlane.f32.xlu0 %v147
    %v149 = vpop.xlane.xlu0 %148
    %v150 = vsel %vm107, %v57, 0.0
    %151 = vadd.xlane.f32.xlu0 %v150
    %v152 = vpop.xlane.xlu0 %151
    %v153 = vsel %vm107, %v58, 0.0
    %154 = vadd.xlane.f32.xlu0 %v153
    %v155 = vpop.xlane.xlu0 %154
    %v156 = vsel %vm107, %v59, 0.0
    %157 = vadd.xlane.f32.xlu0 %v156
    %v158 = vpop.xlane.xlu0 %157
    %v159 = vsel %vm107, %v60, 0.0
    %160 = vadd.xlane.f32.xlu0 %v159
    %v161 = vpop.xlane.xlu0 %160
    %v162 = vsel %vm107, %v61, 0.0
    %163 = vadd.xlane.f32.xlu0 %v162
    %v164 = vpop.xlane.xlu0 %163
    %v165 = vsel %vm107, %v62, 0.0
    %166 = vadd.xlane.f32.xlu0 %v165
    %v167 = vpop.xlane.xlu0 %166
    %v168 = vsel %vm107, %v63, 0.0
    %169 = vadd.xlane.f32.xlu0 %v168
    %v170 = vpop.xlane.xlu0 %169
    %v171 = vsel %vm107, %v64, 0.0
    %172 = vadd.xlane.f32.xlu0 %v171
    %v173 = vpop.xlane.xlu0 %172
    %v174 = vsel %vm107, %v65, 0.0
    %175 = vadd.xlane.f32.xlu0 %v174
    %v176 = vpop.xlane.xlu0 %175
    %v177 = vsel %vm107, %v66, 0.0
    %178 = vadd.xlane.f32.xlu0 %v177
    %v179 = vpop.xlane.xlu0 %178
    %v180 = vsel %vm107, %v67, 0.0
    %181 = vadd.xlane.f32.xlu0 %v180
    %v182 = vpop.xlane.xlu0 %181
    %v183 = vsel %vm107, %v68, 0.0
    %184 = vadd.xlane.f32.xlu0 %v183
    %v185 = vpop.xlane.xlu0 %184
    %v186 = vsel %vm107, %v69, 0.0
    %187 = vadd.xlane.f32.xlu0 %v186
    %v188 = vpop.xlane.xlu0 %187
    %v189 = vsel %vm107, %v70, 0.0
    %190 = vadd.xlane.f32.xlu0 %v189
    %v191 = vpop.xlane.xlu0 %190
    %v192 = vsel %vm107, %v71, 0.0
    %193 = vadd.xlane.f32.xlu0 %v192
    %v194 = vpop.xlane.xlu0 %193
    %v195 = vsel %vm107, %v72, 0.0
    %196 = vadd.xlane.f32.xlu0 %v195
    %v197 = vpop.xlane.xlu0 %196
    %v198 = vsel %vm107, %v73, 0.0
    %199 = vadd.xlane.f32.xlu0 %v198
    %v200 = vpop.xlane.xlu0 %199
    %v201 = vsel %vm107, %v74, 0.0
    %202 = vadd.xlane.f32.xlu0 %v201
    %v203 = vpop.xlane.xlu0 %202
    %v204 = vsel %vm107, %v75, 0.0
    %205 = vadd.xlane.f32.xlu0 %v204
    %v206 = vpop.xlane.xlu0 %205
    %v207 = vsel %vm107, %v76, 0.0
    %208 = vadd.xlane.f32.xlu0 %v207
    %v209 = vpop.xlane.xlu0 %208
    %v210 = vsel %vm107, %v77, 0.0
    %211 = vadd.xlane.f32.xlu0 %v210
    %v212 = vpop.xlane.xlu0 %211
    %v213 = vsel %vm107, %v78, 0.0
    %214 = vadd.xlane.f32.xlu0 %v213
    %v215 = vpop.xlane.xlu0 %214
    %v216 = vsel %vm107, %v79, 0.0
    %217 = vadd.xlane.f32.xlu0 %v216
    %v218 = vpop.xlane.xlu0 %217
    %v219 = vsel %vm107, %v80, 0.0
    %220 = vadd.xlane.f32.xlu0 %v219
    %v221 = vpop.xlane.xlu0 %220
    %v222 = vsel %vm107, %v81, 0.0
    %223 = vadd.xlane.f32.xlu0 %v222
    %v224 = vpop.xlane.xlu0 %223
    %v225 = vsel %vm107, %v82, 0.0
    %226 = vadd.xlane.f32.xlu0 %v225
    %v227 = vpop.xlane.xlu0 %226
    %v228 = vsel %vm107, %v83, 0.0
    %229 = vadd.xlane.f32.xlu0 %v228
    %v230 = vpop.xlane.xlu0 %229
    %v231 = vsel %vm107, %v84, 0.0
    %232 = vadd.xlane.f32.xlu0 %v231
    %v233 = vpop.xlane.xlu0 %232
    %v234 = vsel %vm107, %v85, 0.0
    %235 = vadd.xlane.f32.xlu0 %v234
    %v236 = vpop.xlane.xlu0 %235
    %v237 = vsel %vm107, %v86, 0.0
    %238 = vadd.xlane.f32.xlu0 %v237
    %v239 = vpop.xlane.xlu0 %238
    %v240 = vsel %vm107, %v87, 0.0
    %241 = vadd.xlane.f32.xlu0 %v240
    %v242 = vpop.xlane.xlu0 %241
    %v243 = vsel %vm107, %v88, 0.0
    %244 = vadd.xlane.f32.xlu0 %v243
    %v245 = vpop.xlane.xlu0 %244
    %v246 = vsel %vm107, %v89, 0.0
    %247 = vadd.xlane.f32.xlu0 %v246
    %v248 = vpop.xlane.xlu0 %247
    %v249 = vsel %vm107, %v90, 0.0
    %250 = vadd.xlane.f32.xlu0 %v249
    %v251 = vpop.xlane.xlu0 %250
    %v252 = vsel %vm107, %v91, 0.0
    %253 = vadd.xlane.f32.xlu0 %v252
    %v254 = vpop.xlane.xlu0 %253
    %v255 = vsel %vm107, %v92, 0.0
    %256 = vadd.xlane.f32.xlu0 %v255
    %v257 = vpop.xlane.xlu0 %256
    %v258 = vsel %vm107, %v93, 0.0
    %259 = vadd.xlane.f32.xlu0 %v258
    %v260 = vpop.xlane.xlu0 %259
    %v261 = vsel %vm107, %v94, 0.0
    %262 = vadd.xlane.f32.xlu0 %v261
    %v263 = vpop.xlane.xlu0 %262
    %v264 = vsel %vm107, %v95, 0.0
    %265 = vadd.xlane.f32.xlu0 %v264
    %v266 = vpop.xlane.xlu0 %265
    %v267 = vsel %vm107, %v96, 0.0
    %268 = vadd.xlane.f32.xlu0 %v267
    %v269 = vpop.xlane.xlu0 %268
    %v270 = vsel %vm107, %v97, 0.0
    %271 = vadd.xlane.f32.xlu0 %v270
    %v272 = vpop.xlane.xlu0 %271
    %v273 = vsel %vm107, %v98, 0.0
    %274 = vadd.xlane.f32.xlu0 %v273
    %v275 = vpop.xlane.xlu0 %274
    %v276 = vsel %vm107, %v99, 0.0
    %277 = vadd.xlane.f32.xlu0 %v276
    %v278 = vpop.xlane.xlu0 %277
    %v279 = vsel %vm107, %v100, 0.0
    %280 = vadd.xlane.f32.xlu0 %v279
    %v281 = vpop.xlane.xlu0 %280
    %v282 = vsel %vm107, %v101, 0.0
    %283 = vadd.xlane.f32.xlu0 %v282
    %v284 = vpop.xlane.xlu0 %283
    %v285 = vsel %vm107, %v102, 0.0
    %286 = vadd.xlane.f32.xlu0 %v285
    %v287 = vpop.xlane.xlu0 %286
    %v288 = vsel %vm107, %v103, 0.0
    %289 = vadd.xlane.f32.xlu0 %v288
    %v290 = vpop.xlane.xlu0 %289
    %v291 = vsel %vm107, %v104, 0.0
    %292 = vadd.xlane.f32.xlu0 %v291
    %v293 = vpop.xlane.xlu0 %292
    %v294 = vsel %vm107, %v105, 0.0
    %295 = vadd.xlane.f32.xlu0 %v294
    %v296 = vpop.xlane.xlu0 %295
    %v297 = vsel %vm107, %v106, 0.0
    %298 = vadd.xlane.f32.xlu0 %v297
    %v299 = vpop.xlane.xlu0 %298
    %v300 = vmul.f32 %v110, 0.015625
    %v301 = vmul.f32 %v113, 0.015625
    %v302 = vmul.f32 %v116, 0.015625
    %v303 = vmul.f32 %v119, 0.015625
    %v304 = vmul.f32 %v122, 0.015625
    %v305 = vmul.f32 %v125, 0.015625
    %v306 = vmul.f32 %v128, 0.015625
    %v307 = vmul.f32 %v131, 0.015625
    %v308 = vmul.f32 %v134, 0.015625
    %v309 = vmul.f32 %v137, 0.015625
    %v310 = vmul.f32 %v140, 0.015625
    %v311 = vmul.f32 %v143, 0.015625
    %v312 = vmul.f32 %v146, 0.015625
    %v313 = vmul.f32 %v149, 0.015625
    %v314 = vmul.f32 %v152, 0.015625
    %v315 = vmul.f32 %v155, 0.015625
    %v316 = vmul.f32 %v158, 0.015625
    %v317 = vmul.f32 %v161, 0.015625
    %v318 = vmul.f32 %v164, 0.015625
    %v319 = vmul.f32 %v167, 0.015625
    %v320 = vmul.f32 %v170, 0.015625
    %v321 = vmul.f32 %v173, 0.015625
    %v322 = vmul.f32 %v176, 0.015625
    %v323 = vmul.f32 %v179, 0.015625
    %v324 = vmul.f32 %v182, 0.015625
    %v325 = vmul.f32 %v185, 0.015625
    %v326 = vmul.f32 %v188, 0.015625
    %v327 = vmul.f32 %v191, 0.015625
    %v328 = vmul.f32 %v194, 0.015625
    %v329 = vmul.f32 %v197, 0.015625
    %v330 = vmul.f32 %v200, 0.015625
    %v331 = vmul.f32 %v203, 0.015625
    %v332 = vmul.f32 %v206, 0.015625
    %v333 = vmul.f32 %v209, 0.015625
    %v334 = vmul.f32 %v212, 0.015625
    %v335 = vmul.f32 %v215, 0.015625
    %v336 = vmul.f32 %v218, 0.015625
    %v337 = vmul.f32 %v221, 0.015625
    %v338 = vmul.f32 %v224, 0.015625
    %v339 = vmul.f32 %v227, 0.015625
    %v340 = vmul.f32 %v230, 0.015625
    %v341 = vmul.f32 %v233, 0.015625
    %v342 = vmul.f32 %v236, 0.015625
    %v343 = vmul.f32 %v239, 0.015625
    %v344 = vmul.f32 %v242, 0.015625
    %v345 = vmul.f32 %v245, 0.015625
    %v346 = vmul.f32 %v248, 0.015625
    %v347 = vmul.f32 %v251, 0.015625
    %v348 = vmul.f32 %v254, 0.015625
    %v349 = vmul.f32 %v257, 0.015625
    %v350 = vmul.f32 %v260, 0.015625
    %v351 = vmul.f32 %v263, 0.015625
    %v352 = vmul.f32 %v266, 0.015625
    %v353 = vmul.f32 %v269, 0.015625
    %v354 = vmul.f32 %v272, 0.015625
    %v355 = vmul.f32 %v275, 0.015625
    %v356 = vmul.f32 %v278, 0.015625
    %v357 = vmul.f32 %v281, 0.015625
    %v358 = vmul.f32 %v284, 0.015625
    %v359 = vmul.f32 %v287, 0.015625
    %v360 = vmul.f32 %v290, 0.015625
    %v361 = vmul.f32 %v293, 0.015625
    %v362 = vmul.f32 %v296, 0.015625
    %v363 = vmul.f32 %v299, 0.015625
    %v364 = vld [vmem:[#allocation5] sm:$0xff]
    %v365 = vld [vmem:[#allocation5 + $0x8] sm:$0xff]
    %v366 = vld [vmem:[#allocation5 + $0x10] sm:$0xff]
    %v367 = vld [vmem:[#allocation5 + $0x18] sm:$0xff]
    %v368 = vld [vmem:[#allocation5 + $0x20] sm:$0xff]
    %v369 = vld [vmem:[#allocation5 + $0x28] sm:$0xff]
    %v370 = vld [vmem:[#allocation5 + $0x30] sm:$0xff]
    %v371 = vld [vmem:[#allocation5 + $0x38] sm:$0xff]
    %v372 = vld [vmem:[%s2] sm:$0x1]
    %v374 = vlaneseq
    %v375 = vshrl.u32 %v374, 7
    %v376 = vsub.s32 0, %v375
    %v377 = vrot.slane %v372, %v376
    %v443 = vlaneseq
    %v444 = vand.u32 %v443, 127
    %v445 = vlaneseq
    %v446 = vshrl.u32 %v445, 7
    %v447 = vsub.s32 %v444, %v446
    %v448 = vrot.slane %v300, %v447
    %v449 = vadd.s32 %v444, 4294967288
    %v450 = vlaneseq
    %v451 = vshrl.u32 %v450, 7
    %v452 = vsub.s32 %v449, %v451
    %v453 = vrot.slane %v301, %v452
    %vm454 = vcmask 130112
    %v455 = vsel %vm454, %v453, %v448
    %v456 = vadd.s32 %v444, 4294967280
    %v457 = vlaneseq
    %v458 = vshrl.u32 %v457, 7
    %v459 = vsub.s32 %v456, %v458
    %v460 = vrot.slane %v302, %v459
    %vm461 = vcmask 195712
    %v462 = vsel %vm461, %v460, %v455
    %v463 = vadd.s32 %v444, 4294967272
    %v464 = vlaneseq
    %v465 = vshrl.u32 %v464, 7
    %v466 = vsub.s32 %v463, %v465
    %v467 = vrot.slane %v303, %v466
    %vm468 = vcmask 261312
    %v469 = vsel %vm468, %v467, %v462
    %v470 = vadd.s32 %v444, 4294967264
    %v471 = vlaneseq
    %v472 = vshrl.u32 %v471, 7
    %v473 = vsub.s32 %v470, %v472
    %v474 = vrot.slane %v304, %v473
    %vm475 = vcmask 326912
    %v476 = vsel %vm475, %v474, %v469
    %v477 = vadd.s32 %v444, 4294967256
    %v478 = vlaneseq
    %v479 = vshrl.u32 %v478, 7
    %v480 = vsub.s32 %v477, %v479
    %v481 = vrot.slane %v305, %v480
    %vm482 = vcmask 392512
    %v483 = vsel %vm482, %v481, %v476
    %v484 = vadd.s32 %v444, 4294967248
    %v485 = vlaneseq
    %v486 = vshrl.u32 %v485, 7
    %v487 = vsub.s32 %v484, %v486
    %v488 = vrot.slane %v306, %v487
    %vm489 = vcmask 458112
    %v490 = vsel %vm489, %v488, %v483
    %v491 = vadd.s32 %v444, 4294967240
    %v492 = vlaneseq
    %v493 = vshrl.u32 %v492, 7
    %v494 = vsub.s32 %v491, %v493
    %v495 = vrot.slane %v307, %v494
    %vm496 = vcmask 523712
    %v497 = vsel %vm496, %v495, %v490
    %v498 = vlaneseq
    %v499 = vshrl.u32 %v498, 7
    %v500 = vsub.s32 %v444, %v499
    %v501 = vrot.slane %v308, %v500
    %v502 = vlaneseq
    %v503 = vshrl.u32 %v502, 7
    %v504 = vsub.s32 %v449, %v503
    %v505 = vrot.slane %v309, %v504
    %v506 = vsel %vm454, %v505, %v501
    %v507 = vlaneseq
    %v508 = vshrl.u32 %v507, 7
    %v509 = vsub.s32 %v456, %v508
    %v510 = vrot.slane %v310, %v509
    %v511 = vsel %vm461, %v510, %v506
    %v512 = vlaneseq
    %v513 = vshrl.u32 %v512, 7
    %v514 = vsub.s32 %v463, %v513
    %v515 = vrot.slane %v311, %v514
    %v516 = vsel %vm468, %v515, %v511
    %v517 = vlaneseq
    %v518 = vshrl.u32 %v517, 7
    %v519 = vsub.s32 %v470, %v518
    %v520 = vrot.slane %v312, %v519
    %v521 = vsel %vm475, %v520, %v516
    %v522 = vlaneseq
    %v523 = vshrl.u32 %v522, 7
    %v524 = vsub.s32 %v477, %v523
    %v525 = vrot.slane %v313, %v524
    %v526 = vsel %vm482, %v525, %v521
    %v527 = vlaneseq
    %v528 = vshrl.u32 %v527, 7
    %v529 = vsub.s32 %v484, %v528
    %v530 = vrot.slane %v314, %v529
    %v531 = vsel %vm489, %v530, %v526
    %v532 = vlaneseq
    %v533 = vshrl.u32 %v532, 7
    %v534 = vsub.s32 %v491, %v533
    %v535 = vrot.slane %v315, %v534
    %v536 = vsel %vm496, %v535, %v531
    %v537 = vlaneseq
    %v538 = vshrl.u32 %v537, 7
    %v539 = vsub.s32 %v444, %v538
    %v540 = vrot.slane %v316, %v539
    %v541 = vlaneseq
    %v542 = vshrl.u32 %v541, 7
    %v543 = vsub.s32 %v449, %v542
    %v544 = vrot.slane %v317, %v543
    %v545 = vsel %vm454, %v544, %v540
    %v546 = vlaneseq
    %v547 = vshrl.u32 %v546, 7
    %v548 = vsub.s32 %v456, %v547
    %v549 = vrot.slane %v318, %v548
    %v550 = vsel %vm461, %v549, %v545
    %v551 = vlaneseq
    %v552 = vshrl.u32 %v551, 7
    %v553 = vsub.s32 %v463, %v552
    %v554 = vrot.slane %v319, %v553
    %v555 = vsel %vm468, %v554, %v550
    %v556 = vlaneseq
    %v557 = vshrl.u32 %v556, 7
    %v558 = vsub.s32 %v470, %v557
    %v559 = vrot.slane %v320, %v558
    %v560 = vsel %vm475, %v559, %v555
    %v561 = vlaneseq
    %v562 = vshrl.u32 %v561, 7
    %v563 = vsub.s32 %v477, %v562
    %v564 = vrot.slane %v321, %v563
    %v565 = vsel %vm482, %v564, %v560
    %v566 = vlaneseq
    %v567 = vshrl.u32 %v566, 7
    %v568 = vsub.s32 %v484, %v567
    %v569 = vrot.slane %v322, %v568
    %v570 = vsel %vm489, %v569, %v565
    %v571 = vlaneseq
    %v572 = vshrl.u32 %v571, 7
    %v573 = vsub.s32 %v491, %v572
    %v574 = vrot.slane %v323, %v573
    %v575 = vsel %vm496, %v574, %v570
    %v576 = vlaneseq
    %v577 = vshrl.u32 %v576, 7
    %v578 = vsub.s32 %v444, %v577
    %v579 = vrot.slane %v324, %v578
    %v580 = vlaneseq
    %v581 = vshrl.u32 %v580, 7
    %v582 = vsub.s32 %v449, %v581
    %v583 = vrot.slane %v325, %v582
    %v584 = vsel %vm454, %v583, %v579
    %v585 = vlaneseq
    %v586 = vshrl.u32 %v585, 7
    %v587 = vsub.s32 %v456, %v586
    %v588 = vrot.slane %v326, %v587
    %v589 = vsel %vm461, %v588, %v584
    %v590 = vlaneseq
    %v591 = vshrl.u32 %v590, 7
    %v592 = vsub.s32 %v463, %v591
    %v593 = vrot.slane %v327, %v592
    %v594 = vsel %vm468, %v593, %v589
    %v595 = vlaneseq
    %v596 = vshrl.u32 %v595, 7
    %v597 = vsub.s32 %v470, %v596
    %v598 = vrot.slane %v328, %v597
    %v599 = vsel %vm475, %v598, %v594
    %v600 = vlaneseq
    %v601 = vshrl.u32 %v600, 7
    %v602 = vsub.s32 %v477, %v601
    %v603 = vrot.slane %v329, %v602
    %v604 = vsel %vm482, %v603, %v599
    %v605 = vlaneseq
    %v606 = vshrl.u32 %v605, 7
    %v607 = vsub.s32 %v484, %v606
    %v608 = vrot.slane %v330, %v607
    %v609 = vsel %vm489, %v608, %v604
    %v610 = vlaneseq
    %v611 = vshrl.u32 %v610, 7
    %v612 = vsub.s32 %v491, %v611
    %v613 = vrot.slane %v331, %v612
    %v614 = vsel %vm496, %v613, %v609
    %v615 = vlaneseq
    %v616 = vshrl.u32 %v615, 7
    %v617 = vsub.s32 %v444, %v616
    %v618 = vrot.slane %v332, %v617
    %v619 = vlaneseq
    %v620 = vshrl.u32 %v619, 7
    %v621 = vsub.s32 %v449, %v620
    %v622 = vrot.slane %v333, %v621
    %v623 = vsel %vm454, %v622, %v618
    %v624 = vlaneseq
    %v625 = vshrl.u32 %v624, 7
    %v626 = vsub.s32 %v456, %v625
    %v627 = vrot.slane %v334, %v626
    %v628 = vsel %vm461, %v627, %v623
    %v629 = vlaneseq
    %v630 = vshrl.u32 %v629, 7
    %v631 = vsub.s32 %v463, %v630
    %v632 = vrot.slane %v335, %v631
    %v633 = vsel %vm468, %v632, %v628
    %v634 = vlaneseq
    %v635 = vshrl.u32 %v634, 7
    %v636 = vsub.s32 %v470, %v635
    %v637 = vrot.slane %v336, %v636
    %v638 = vsel %vm475, %v637, %v633
    %v639 = vlaneseq
    %v640 = vshrl.u32 %v639, 7
    %v641 = vsub.s32 %v477, %v640
    %v642 = vrot.slane %v337, %v641
    %v643 = vsel %vm482, %v642, %v638
    %v644 = vlaneseq
    %v645 = vshrl.u32 %v644, 7
    %v646 = vsub.s32 %v484, %v645
    %v647 = vrot.slane %v338, %v646
    %v648 = vsel %vm489, %v647, %v643
    %v649 = vlaneseq
    %v650 = vshrl.u32 %v649, 7
    %v651 = vsub.s32 %v491, %v650
    %v652 = vrot.slane %v339, %v651
    %v653 = vsel %vm496, %v652, %v648
    %v654 = vlaneseq
    %v655 = vshrl.u32 %v654, 7
    %v656 = vsub.s32 %v444, %v655
    %v657 = vrot.slane %v340, %v656
    %v658 = vlaneseq
    %v659 = vshrl.u32 %v658, 7
    %v660 = vsub.s32 %v449, %v659
    %v661 = vrot.slane %v341, %v660
    %v662 = vsel %vm454, %v661, %v657
    %v663 = vlaneseq
    %v664 = vshrl.u32 %v663, 7
    %v665 = vsub.s32 %v456, %v664
    %v666 = vrot.slane %v342, %v665
    %v667 = vsel %vm461, %v666, %v662
    %v668 = vlaneseq
    %v669 = vshrl.u32 %v668, 7
    %v670 = vsub.s32 %v463, %v669
    %v671 = vrot.slane %v343, %v670
    %v672 = vsel %vm468, %v671, %v667
    %v673 = vlaneseq
    %v674 = vshrl.u32 %v673, 7
    %v675 = vsub.s32 %v470, %v674
    %v676 = vrot.slane %v344, %v675
    %v677 = vsel %vm475, %v676, %v672
    %v678 = vlaneseq
    %v679 = vshrl.u32 %v678, 7
    %v680 = vsub.s32 %v477, %v679
    %v681 = vrot.slane %v345, %v680
    %v682 = vsel %vm482, %v681, %v677
    %v683 = vlaneseq
    %v684 = vshrl.u32 %v683, 7
    %v685 = vsub.s32 %v484, %v684
    %v686 = vrot.slane %v346, %v685
    %v687 = vsel %vm489, %v686, %v682
    %v688 = vlaneseq
    %v689 = vshrl.u32 %v688, 7
    %v690 = vsub.s32 %v491, %v689
    %v691 = vrot.slane %v347, %v690
    %v692 = vsel %vm496, %v691, %v687
    %v693 = vlaneseq
    %v694 = vshrl.u32 %v693, 7
    %v695 = vsub.s32 %v444, %v694
    %v696 = vrot.slane %v348, %v695
    %v697 = vlaneseq
    %v698 = vshrl.u32 %v697, 7
    %v699 = vsub.s32 %v449, %v698
    %v700 = vrot.slane %v349, %v699
    %v701 = vsel %vm454, %v700, %v696
    %v702 = vlaneseq
    %v703 = vshrl.u32 %v702, 7
    %v704 = vsub.s32 %v456, %v703
    %v705 = vrot.slane %v350, %v704
    %v706 = vsel %vm461, %v705, %v701
    %v707 = vlaneseq
    %v708 = vshrl.u32 %v707, 7
    %v709 = vsub.s32 %v463, %v708
    %v710 = vrot.slane %v351, %v709
    %v711 = vsel %vm468, %v710, %v706
    %v712 = vlaneseq
    %v713 = vshrl.u32 %v712, 7
    %v714 = vsub.s32 %v470, %v713
    %v715 = vrot.slane %v352, %v714
    %v716 = vsel %vm475, %v715, %v711
    %v717 = vlaneseq
    %v718 = vshrl.u32 %v717, 7
    %v719 = vsub.s32 %v477, %v718
    %v720 = vrot.slane %v353, %v719
    %v721 = vsel %vm482, %v720, %v716
    %v722 = vlaneseq
    %v723 = vshrl.u32 %v722, 7
    %v724 = vsub.s32 %v484, %v723
    %v725 = vrot.slane %v354, %v724
    %v726 = vsel %vm489, %v725, %v721
    %v727 = vlaneseq
    %v728 = vshrl.u32 %v727, 7
    %v729 = vsub.s32 %v491, %v728
    %v730 = vrot.slane %v355, %v729
    %v731 = vsel %vm496, %v730, %v726
    %v732 = vlaneseq
    %v733 = vshrl.u32 %v732, 7
    %v734 = vsub.s32 %v444, %v733
    %v735 = vrot.slane %v356, %v734
    %v736 = vlaneseq
    %v737 = vshrl.u32 %v736, 7
    %v738 = vsub.s32 %v449, %v737
    %v739 = vrot.slane %v357, %v738
    %v740 = vsel %vm454, %v739, %v735
    %v741 = vlaneseq
    %v742 = vshrl.u32 %v741, 7
    %v743 = vsub.s32 %v456, %v742
    %v744 = vrot.slane %v358, %v743
    %v745 = vsel %vm461, %v744, %v740
    %v746 = vlaneseq
    %v747 = vshrl.u32 %v746, 7
    %v748 = vsub.s32 %v463, %v747
    %v749 = vrot.slane %v359, %v748
    %v750 = vsel %vm468, %v749, %v745
    %v751 = vlaneseq
    %v752 = vshrl.u32 %v751, 7
    %v753 = vsub.s32 %v470, %v752
    %v754 = vrot.slane %v360, %v753
    %v755 = vsel %vm475, %v754, %v750
    %v756 = vlaneseq
    %v757 = vshrl.u32 %v756, 7
    %v758 = vsub.s32 %v477, %v757
    %v759 = vrot.slane %v361, %v758
    %v760 = vsel %vm482, %v759, %v755
    %v761 = vlaneseq
    %v762 = vshrl.u32 %v761, 7
    %v763 = vsub.s32 %v484, %v762
    %v764 = vrot.slane %v362, %v763
    %v765 = vsel %vm489, %v764, %v760
    %v766 = vlaneseq
    %v767 = vshrl.u32 %v766, 7
    %v768 = vsub.s32 %v491, %v767
    %v769 = vrot.slane %v363, %v768
    %v770 = vsel %vm496, %v769, %v765
    %vm771 = vcmask 1041409
    %v772 = vsel %vm771, %v536, %v497
    %vm773 = vcmask 1042434
    %v774 = vsel %vm773, %v575, %v772
    %vm775 = vcmask 1043459
    %v776 = vsel %vm775, %v614, %v774
    %vm777 = vcmask 1044484
    %v778 = vsel %vm777, %v653, %v776
    %vm779 = vcmask 1045509
    %v780 = vsel %vm779, %v692, %v778
    %vm781 = vcmask 1046534
    %v782 = vsel %vm781, %v731, %v780
    %vm783 = vcmask 1047559
    %v784 = vsel %vm783, %v770, %v782
    %v785 = vsel %vm107, %v784, 0
    %787 = vmatprep.subr.mxu0 0.0
    %788 = vmatpush1.msra.mxu0 %v364
    %789 = vmatprep.subr.mxu0 0.0
    %790 = vmatpush1.msra.mxu0 %v365
    %791 = vmatprep.subr.mxu0 0.0
    %792 = vmatpush1.msra.mxu0 %v366
    %793 = vmatprep.subr.mxu0 0.0
    %794 = vmatpush1.msra.mxu0 %v367
    %795 = vmatprep.subr.mxu0 0.0
    %796 = vmatpush1.msra.mxu0 %v368
    %797 = vmatprep.subr.mxu0 0.0
    %798 = vmatpush1.msra.mxu0 %v369
    %799 = vmatprep.subr.mxu0 0.0
    %800 = vmatpush1.msra.mxu0 %v370
    %801 = vmatprep.subr.mxu0 0.0
    %802 = vmatpush1.msra.mxu0 %v371
    %803 = vmatprep.subr.mxu0 0.0
    %804 = vmatpush1.msra.mxu0 0.0
    %805 = vmatprep.subr.mxu0 0.0
    %806 = vmatpush1.msra.mxu0 0.0
    %807 = vmatprep.subr.mxu0 0.0
    %808 = vmatpush1.msra.mxu0 0.0
    %809 = vmatprep.subr.mxu0 0.0
    %810 = vmatpush1.msra.mxu0 0.0
    %811 = vmatprep.subr.mxu0 0.0
    %812 = vmatpush1.msra.mxu0 0.0
    %813 = vmatprep.subr.mxu0 0.0
    %814 = vmatpush1.msra.mxu0 0.0
    %815 = vmatprep.subr.mxu0 0.0
    %816 = vmatpush1.msra.mxu0 0.0
    %817 = vmatprep.subr.mxu0 0.0
    %818 = vmatpush1.msra.mxu0 0.0
    %819 = vmatprep.subr.mxu0 0.0
    %820 = vmatpush1.msra.mxu0 0.0
    %821 = vmatprep.subr.mxu0 0.0
    %822 = vmatpush1.msra.mxu0 0.0
    %823 = vmatprep.subr.mxu0 0.0
    %824 = vmatpush1.msra.mxu0 0.0
    %825 = vmatprep.subr.mxu0 0.0
    %826 = vmatpush1.msra.mxu0 0.0
    %827 = vmatprep.subr.mxu0 0.0
    %828 = vmatpush1.msra.mxu0 0.0
    %829 = vmatprep.subr.mxu0 0.0
    %830 = vmatpush1.msra.mxu0 0.0
    %831 = vmatprep.subr.mxu0 0.0
    %832 = vmatpush1.msra.mxu0 0.0
    %833 = vmatprep.subr.mxu0 0.0
    %834 = vmatpush1.msra.mxu0 0.0
    %835 = vmatprep.subr.mxu0 0.0
    %836 = vmatpush1.msra.mxu0 0.0
    %837 = vmatprep.subr.mxu0 0.0
    %838 = vmatpush1.msra.mxu0 0.0
    %839 = vmatprep.subr.mxu0 0.0
    %840 = vmatpush1.msra.mxu0 0.0
    %841 = vmatprep.subr.mxu0 0.0
    %842 = vmatpush1.msra.mxu0 0.0
    %843 = vmatprep.subr.mxu0 0.0
    %844 = vmatpush1.msra.mxu0 0.0
    %845 = vmatprep.subr.mxu0 0.0
    %846 = vmatpush1.msra.mxu0 0.0
    %847 = vmatprep.subr.mxu0 0.0
    %848 = vmatpush1.msra.mxu0 0.0
    %849 = vmatprep.subr.mxu0 0.0
    %850 = vmatpush1.msra.mxu0 0.0
    %851 = vmatprep.mubr.f32.mxu0 0.0
    %852 = vmatmul.mubr.f32.gmra.mrb[0].mxu0 %v785
    %v853 = vpop.f32.mrb[0].mxu0
    %v854 = vadd.f32 %v377, %v853
    %v855 = vpop.f32.mrb[0].mxu0
    %856 = vdwg.mxu0
    %857 = vst [vmem:[#allocation7] sm:$0xff] %v854
    // Predicated region
    $region22: #{tpu_custom_call.1} parent=1 // pred_check
      _
    $region23: #{tpu_custom_call.1} parent=1 // pred_check_branch
      %859 = sbr.rel (0) target = $region25
    $region24: #{tpu_custom_call.1} parent=1 // pred_region
      %s861 = ssub.s32 128, 128
      %862 = vsyncadd [#allocation4], %s861
      %s864 = sshll.u32 [#allocation7], 4
      %s865 = int_to_ptr.vmem [resolvable:$true] %s864
      %867 = dma.vmem_to_hbm [thread:$0]  %s865, 128, %s3, [#allocation4]
    $region25: #{tpu_custom_call.1} parent=1 // pred_fallthru
      _
    // Predicated region
    $region26: #{tpu_custom_call.1} parent=1 // pred_check
      _
    $region27: #{tpu_custom_call.1} parent=1 // pred_check_branch
      %869 = sbr.rel (0) target = $region29
    $region28: #{tpu_custom_call.1} parent=1 // pred_region
      %870 = dma.done [#allocation4], 128
    $region29: #{tpu_custom_call.1} parent=1 // pred_fallthru
      _
    %871 = vsyncpa [#allocation3], 1
    %872 = vsyncpa [#allocation6], 1
    %873 = vsyncpa [#allocation4], 1

</llo_original>
